<compile_context>
chip_gen: v7x
topology: tpu7x:2x2x1
jax: 0.10.0
libtpu: 0.0.40
codegen_flags: <defaults>
</compile_context>

<pallas_src>
import jax
import jax.numpy as jnp
from jax.experimental import pallas as pl
from jax.experimental.pallas import tpu as pltpu

IN_F = 28 * 28        # 784 (multiple of 16 -> fine as w1 sublane dim / x lane dim)
H1 = 128
H2_PAD = 128          # fc2 out 64 -> padded to 128 lanes
OUT_PAD = 128         # fc3 out 10 -> padded to 128 lanes
NUM_CLASSES = 10
NEG_INF = -1e30
ALIGN = 16            # sublane alignment legal for both f32 (8) and bf16 (16) tiles


def mlp_kernel(x_ref, w1_ref, b1_ref, w2_ref, b2_ref, w3_ref, b3_ref, o_ref):
    # x arrives as raw f32 straight from HBM; cast to bf16 only for the MXU.
    x = x_ref[...].astype(jnp.bfloat16)                              # [TB, 784]

    # fc1 + ReLU (bf16 MXU inputs, f32 accumulation + elementwise)
    h1 = jnp.dot(x, w1_ref[...], preferred_element_type=jnp.float32) + b1_ref[...]
    h1 = jnp.maximum(h1, 0.0)                                        # [TB, 128] f32

    # fc2 + ReLU (output padded to 128 lanes; padded columns stay 0 after ReLU)
    h2 = jnp.dot(h1.astype(jnp.bfloat16), w2_ref[...],
                 preferred_element_type=jnp.float32) + b2_ref[...]
    h2 = jnp.maximum(h2, 0.0)                                        # [TB, 128] f32

    # fc3 (padded bias columns are -1e30 -> exp() contributes exactly 0 below)
    logits = jnp.dot(h2.astype(jnp.bfloat16), w3_ref[...],
                     preferred_element_type=jnp.float32) + b3_ref[...]  # [TB, 128]

    # numerically stable log_softmax over the lane axis
    m = jnp.max(logits, axis=1, keepdims=True)
    shifted = logits - m
    lse = jnp.log(jnp.sum(jnp.exp(shifted), axis=1, keepdims=True))
    o_ref[...] = (shifted - lse).astype(o_ref.dtype)                 # bf16 store


def _round_up(n, m):
    return ((n + m - 1) // m) * m


def pack_params(params):
    """Pad / cast the [in, out]-layout f32 params for the kernel. Call ONCE and reuse."""
    w1, b1, w2, b2, w3, b3 = params
    w1p = w1.astype(jnp.bfloat16)                                           # [784, 128]
    b1p = b1.reshape(1, H1).astype(jnp.float32)
    w2p = jnp.zeros((H1, H2_PAD), jnp.float32).at[:, :64].set(w2).astype(jnp.bfloat16)
    b2p = jnp.zeros((1, H2_PAD), jnp.float32).at[0, :64].set(b2)
    w3p = jnp.zeros((H2_PAD, OUT_PAD), jnp.float32).at[:64, :NUM_CLASSES].set(w3).astype(jnp.bfloat16)
    b3p = jnp.full((1, OUT_PAD), NEG_INF, jnp.float32).at[0, :NUM_CLASSES].set(b3)
    return w1p, b1p, w2p, b2p, w3p, b3p


def net_forward(x_nchw, packed_params, *, tb=2048):
    """x_nchw: [B, 1, 28, 28] f32, packed_params from pack_params().
    Returns log-probs [B, 10] f32."""
    w1p, b1p, w2p, b2p, w3p, b3p = packed_params

    B = x_nchw.shape[0]
    x = x_nchw.reshape(B, IN_F)            # view-like reshape; stays f32, no pad/cast pass

    # Tile selection: big tiles amortize the ~0.35us/step overhead; keep >=4 grid
    # steps when the batch allows it (v7x megacore) and never exceed the batch.
    tb = max(ALIGN, min(tb, _round_up(pl.cdiv(B, 4), ALIGN)))
    tb = min(tb, _round_up(B, ALIGN))
    bpad = _round_up(B, tb)
    if bpad != B:                           # only pad rows when batch isn't tile-aligned
        x = jnp.pad(x, ((0, bpad - B), (0, 0)))

    grid = (bpad // tb,)
    flops = 2 * bpad * (IN_F * H1 + H1 * H2_PAD + H2_PAD * OUT_PAD)
    bytes_accessed = (bpad * IN_F * 4                                   # f32 x read
                      + (w1p.size + w2p.size + w3p.size) * 2            # bf16 weights
                      + (b1p.size + b2p.size + b3p.size) * 4            # f32 biases
                      + bpad * OUT_PAD * 2)                             # bf16 out write
    cost = pl.CostEstimate(flops=flops,
                           transcendentals=bpad * OUT_PAD,
                           bytes_accessed=bytes_accessed)

    out = pl.pallas_call(
        mlp_kernel,
        out_shape=jax.ShapeDtypeStruct((bpad, OUT_PAD), jnp.bfloat16),
        grid=grid,
        in_specs=[
            pl.BlockSpec((tb, IN_F), lambda i: (i, 0)),         # x streamed (f32)
            pl.BlockSpec((IN_F, H1), lambda i: (0, 0)),         # w1 (VMEM-resident)
            pl.BlockSpec((1, H1), lambda i: (0, 0)),            # b1
            pl.BlockSpec((H1, H2_PAD), lambda i: (0, 0)),       # w2
            pl.BlockSpec((1, H2_PAD), lambda i: (0, 0)),        # b2
            pl.BlockSpec((H2_PAD, OUT_PAD), lambda i: (0, 0)),  # w3
            pl.BlockSpec((1, OUT_PAD), lambda i: (0, 0)),       # b3
        ],
        out_specs=pl.BlockSpec((tb, OUT_PAD), lambda i: (i, 0)),
        compiler_params=pltpu.CompilerParams(
            dimension_semantics=("parallel",),
            vmem_limit_bytes=32 * 1024 * 1024,
        ),
        cost_estimate=cost,
    )(x, w1p, b1p, w2p, b2p, w3p, b3p)

    return out[:B, :NUM_CLASSES].astype(jnp.float32)


def init_params(key):
    """PyTorch-default-style Linear init, weights stored transposed as [in, out]."""
    def linear(key, fan_in, fan_out):
        kw, kb = jax.random.split(key)
        bound = 1.0 / jnp.sqrt(fan_in)
        w = jax.random.uniform(kw, (fan_in, fan_out), jnp.float32, -bound, bound)
        b = jax.random.uniform(kb, (fan_out,), jnp.float32, -bound, bound)
        return w, b

    k1, k2, k3 = jax.random.split(key, 3)
    w1, b1 = linear(k1, IN_F, 128)
    w2, b2 = linear(k2, 128, 64)
    w3, b3 = linear(k3, 64, 10)
    return (w1, b1, w2, b2, w3, b3)


def reference_forward_bf16(x_nchw, params):
    """Pure-JAX reference matching the kernel numerics (bf16 matmul inputs, f32 acc)."""
    w1, b1, w2, b2, w3, b3 = params
    x = x_nchw.reshape(x_nchw.shape[0], IN_F).astype(jnp.bfloat16)
    h1 = jnp.maximum(jnp.dot(x, w1.astype(jnp.bfloat16),
                             preferred_element_type=jnp.float32) + b1, 0.0)
    h2 = jnp.maximum(jnp.dot(h1.astype(jnp.bfloat16), w2.astype(jnp.bfloat16),
                             preferred_element_type=jnp.float32) + b2, 0.0)
    logits = jnp.dot(h2.astype(jnp.bfloat16), w3.astype(jnp.bfloat16),
                     preferred_element_type=jnp.float32) + b3
    return jax.nn.log_softmax(logits, axis=1)


def reference_forward_f32(x_nchw, params):
    """Full-precision reference (original PyTorch semantics)."""
    w1, b1, w2, b2, w3, b3 = params
    x = x_nchw.reshape(x_nchw.shape[0], IN_F)
    h1 = jax.nn.relu(x @ w1 + b1)
    h2 = jax.nn.relu(h1 @ w2 + b2)
    return jax.nn.log_softmax(h2 @ w3 + b3, axis=1)


if __name__ == "__main__":
    key = jax.random.PRNGKey(0)
    kx, kp = jax.random.split(key)

    B = 16
    x = jax.random.normal(kx, (B, 1, 28, 28), jnp.float32)  # NCHW like PyTorch
    params = init_params(kp)

    packed = pack_params(params)          # hoisted: pad/cast weights once, reuse
    fwd = jax.jit(net_forward, static_argnames=("tb",))

    out = jax.block_until_ready(fwd(x, packed))
    assert out.shape == (B, NUM_CLASSES)
    assert out.dtype == jnp.float32

    ref_bf16 = reference_forward_bf16(x, params)
    ref_f32 = reference_forward_f32(x, params)
    # Kernel uses bf16 MXU inputs + bf16 output store (documented numerics choice).
    assert jnp.allclose(out, ref_bf16, atol=3e-2, rtol=3e-2), "mismatch vs bf16 reference"
    assert jnp.allclose(out, ref_f32, atol=6e-2, rtol=6e-2), "mismatch vs f32 reference"

    print("KERNEL_OK")
</pallas_src>

<mosaic_0001>
module attributes {stable_mosaic.version = 11 : i64} {
  func.func @mlp_kernel(%arg0: i32, %arg1: memref<16x784xf32, #tpu.memory_space<vmem>>, %arg2: memref<784x128xbf16, #tpu.memory_space<vmem>>, %arg3: memref<1x128xf32, #tpu.memory_space<vmem>>, %arg4: memref<128x128xbf16, #tpu.memory_space<vmem>>, %arg5: memref<1x128xf32, #tpu.memory_space<vmem>>, %arg6: memref<128x128xbf16, #tpu.memory_space<vmem>>, %arg7: memref<1x128xf32, #tpu.memory_space<vmem>>, %arg8: memref<16x128xbf16, #tpu.memory_space<vmem>>) attributes {dimension_semantics = [#tpu.dimension_semantics<parallel>], iteration_bounds = array<i64: 1>, scalar_prefetch = 0 : i64, scratch_operands = 0 : i64, tpu.core_type = #tpu.core_type<tc>, window_params = [{transform_indices = @transform_0, window_bounds = array<i64: 16, 784>}, {pipeline_mode = #tpu.pipeline_mode<synchronous>, transform_indices = @transform_1, window_bounds = array<i64: 784, 128>}, {pipeline_mode = #tpu.pipeline_mode<synchronous>, transform_indices = @transform_2, window_bounds = array<i64: 1, 128>}, {pipeline_mode = #tpu.pipeline_mode<synchronous>, transform_indices = @transform_3, window_bounds = array<i64: 128, 128>}, {pipeline_mode = #tpu.pipeline_mode<synchronous>, transform_indices = @transform_4, window_bounds = array<i64: 1, 128>}, {pipeline_mode = #tpu.pipeline_mode<synchronous>, transform_indices = @transform_5, window_bounds = array<i64: 128, 128>}, {pipeline_mode = #tpu.pipeline_mode<synchronous>, transform_indices = @transform_6, window_bounds = array<i64: 1, 128>}, {transform_indices = @transform_7, window_bounds = array<i64: 16, 128>}]} {
    %c0 = arith.constant 0 : index
    %c0_0 = arith.constant 0 : index
    %0 = vector.load %arg1[%c0, %c0_0] : memref<16x784xf32, #tpu.memory_space<vmem>>, vector<16x784xf32>
    %1 = arith.truncf %0 : vector<16x784xf32> to vector<16x784xbf16>
    %c0_1 = arith.constant 0 : index
    %c0_2 = arith.constant 0 : index
    %2 = vector.load %arg2[%c0_1, %c0_2] : memref<784x128xbf16, #tpu.memory_space<vmem>>, vector<784x128xbf16>
    %cst = arith.constant dense<0.000000e+00> : vector<16x128xf32>
    %3 = tpu.matmul %1, %2, %cst {dimension_numbers = #tpu.dot_dimension_numbers<[1], [0], [0], [1], [0, 0, 1, 1], [], []>} : vector<16x784xbf16>, vector<784x128xbf16>, vector<16x128xf32> -> vector<16x128xf32>
    %c0_3 = arith.constant 0 : index
    %c0_4 = arith.constant 0 : index
    %4 = vector.load %arg3[%c0_3, %c0_4] : memref<1x128xf32, #tpu.memory_space<vmem>>, vector<1x128xf32>
    %5 = vector.broadcast %4 : vector<1x128xf32> to vector<16x128xf32>
    %6 = arith.addf %3, %5 : vector<16x128xf32>
    %cst_5 = arith.constant 0.000000e+00 : f32
    %7 = vector.broadcast %cst_5 : f32 to vector<16x128xf32>
    %8 = arith.maximumf %6, %7 : vector<16x128xf32>
    %9 = arith.truncf %8 : vector<16x128xf32> to vector<16x128xbf16>
    %c0_6 = arith.constant 0 : index
    %c0_7 = arith.constant 0 : index
    %10 = vector.load %arg4[%c0_6, %c0_7] : memref<128x128xbf16, #tpu.memory_space<vmem>>, vector<128x128xbf16>
    %cst_8 = arith.constant dense<0.000000e+00> : vector<16x128xf32>
    %11 = tpu.matmul %9, %10, %cst_8 {dimension_numbers = #tpu.dot_dimension_numbers<[1], [0], [0], [1], [0, 0, 1, 1], [], []>} : vector<16x128xbf16>, vector<128x128xbf16>, vector<16x128xf32> -> vector<16x128xf32>
    %c0_9 = arith.constant 0 : index
    %c0_10 = arith.constant 0 : index
    %12 = vector.load %arg5[%c0_9, %c0_10] : memref<1x128xf32, #tpu.memory_space<vmem>>, vector<1x128xf32>
    %13 = vector.broadcast %12 : vector<1x128xf32> to vector<16x128xf32>
    %14 = arith.addf %11, %13 : vector<16x128xf32>
    %cst_11 = arith.constant 0.000000e+00 : f32
    %15 = vector.broadcast %cst_11 : f32 to vector<16x128xf32>
    %16 = arith.maximumf %14, %15 : vector<16x128xf32>
    %17 = arith.truncf %16 : vector<16x128xf32> to vector<16x128xbf16>
    %c0_12 = arith.constant 0 : index
    %c0_13 = arith.constant 0 : index
    %18 = vector.load %arg6[%c0_12, %c0_13] : memref<128x128xbf16, #tpu.memory_space<vmem>>, vector<128x128xbf16>
    %cst_14 = arith.constant dense<0.000000e+00> : vector<16x128xf32>
    %19 = tpu.matmul %17, %18, %cst_14 {dimension_numbers = #tpu.dot_dimension_numbers<[1], [0], [0], [1], [0, 0, 1, 1], [], []>} : vector<16x128xbf16>, vector<128x128xbf16>, vector<16x128xf32> -> vector<16x128xf32>
    %c0_15 = arith.constant 0 : index
    %c0_16 = arith.constant 0 : index
    %20 = vector.load %arg7[%c0_15, %c0_16] : memref<1x128xf32, #tpu.memory_space<vmem>>, vector<1x128xf32>
    %21 = vector.broadcast %20 : vector<1x128xf32> to vector<16x128xf32>
    %22 = arith.addf %19, %21 : vector<16x128xf32>
    %cst_17 = arith.constant dense<0xFF800000> : vector<16xf32>
    %23 = vector.multi_reduction <maximumf>, %22, %cst_17 [1] : vector<16x128xf32> to vector<16xf32>
    %24 = vector.shape_cast %23 : vector<16xf32> to vector<16x1xf32>
    %25 = vector.broadcast %24 : vector<16x1xf32> to vector<16x128xf32>
    %26 = arith.subf %22, %25 : vector<16x128xf32>
    %27 = math.exp %26 : vector<16x128xf32>
    %cst_18 = arith.constant dense<0.000000e+00> : vector<16xf32>
    %28 = vector.multi_reduction <add>, %27, %cst_18 [1] : vector<16x128xf32> to vector<16xf32>
    %29 = vector.shape_cast %28 : vector<16xf32> to vector<16x1xf32>
    %30 = math.log %29 : vector<16x1xf32>
    %31 = vector.broadcast %30 : vector<16x1xf32> to vector<16x128xf32>
    %32 = arith.subf %26, %31 : vector<16x128xf32>
    %33 = arith.truncf %32 : vector<16x128xf32> to vector<16x128xbf16>
    %c0_19 = arith.constant 0 : index
    %c0_20 = arith.constant 0 : index
    %34 = vector.load %arg8[%c0_19, %c0_20] : memref<16x128xbf16, #tpu.memory_space<vmem>>, vector<16x128xbf16>
    tpu.vector_store %arg8[%c0_19, %c0_20], %33 {strides = array<i32>} : memref<16x128xbf16, #tpu.memory_space<vmem>>, vector<16x128xbf16>,
    return
  }
  func.func @transform_0(%arg0: i32) -> (i32, i32) {
    %c0_i32 = arith.constant 0 : i32
    %c0_i32_0 = arith.constant 0 : i32
    return %arg0, %c0_i32 : i32, i32
  }
  func.func @transform_1(%arg0: i32) -> (i32, i32) {
    %c0_i32 = arith.constant 0 : i32
    %c0_i32_0 = arith.constant 0 : i32
    %c0_i32_1 = arith.constant 0 : i32
    return %c0_i32, %c0_i32_0 : i32, i32
  }
  func.func @transform_2(%arg0: i32) -> (i32, i32) {
    %c0_i32 = arith.constant 0 : i32
    %c0_i32_0 = arith.constant 0 : i32
    %c0_i32_1 = arith.constant 0 : i32
    return %c0_i32, %c0_i32_0 : i32, i32
  }
  func.func @transform_3(%arg0: i32) -> (i32, i32) {
    %c0_i32 = arith.constant 0 : i32
    %c0_i32_0 = arith.constant 0 : i32
    %c0_i32_1 = arith.constant 0 : i32
    return %c0_i32, %c0_i32_0 : i32, i32
  }
  func.func @transform_4(%arg0: i32) -> (i32, i32) {
    %c0_i32 = arith.constant 0 : i32
    %c0_i32_0 = arith.constant 0 : i32
    %c0_i32_1 = arith.constant 0 : i32
    return %c0_i32, %c0_i32_0 : i32, i32
  }
  func.func @transform_5(%arg0: i32) -> (i32, i32) {
    %c0_i32 = arith.constant 0 : i32
    %c0_i32_0 = arith.constant 0 : i32
    %c0_i32_1 = arith.constant 0 : i32
    return %c0_i32, %c0_i32_0 : i32, i32
  }
  func.func @transform_6(%arg0: i32) -> (i32, i32) {
    %c0_i32 = arith.constant 0 : i32
    %c0_i32_0 = arith.constant 0 : i32
    %c0_i32_1 = arith.constant 0 : i32
    return %c0_i32, %c0_i32_0 : i32, i32
  }
  func.func @transform_7(%arg0: i32) -> (i32, i32) {
    %c0_i32 = arith.constant 0 : i32
    %c0_i32_0 = arith.constant 0 : i32
    return %arg0, %c0_i32 : i32, i32
  }
}

</mosaic_0001>

<llo_original>
// kernel: net_forward.1
$region0: #{net_forward.1}
  #allocation0 [shape = 'u32[]', space=smem, size = 0x4, offset = 0x4, fixed_abs, tag = 'smem constant byte address 0x4 - core index']
  #allocation1 [shape = 'u32[144,128]{1,0:T(1,128)}', space=vmem, size = 0x12000, scoped, tag = 'internal scratch']
  %s0 = inlined_call_operand.vmem [shape: f32[16,784], index: 0, kind: input, shape index: {}]
  %s1 = inlined_call_operand.vmem [shape: bf16[784,128], index: 1, kind: input, shape index: {}]
  %s2 = inlined_call_operand.vmem [shape: f32[1,128], index: 2, kind: input, shape index: {}]
  %s3 = inlined_call_operand.vmem [shape: bf16[128,128], index: 3, kind: input, shape index: {}]
  %s4 = inlined_call_operand.vmem [shape: f32[1,128], index: 4, kind: input, shape index: {}]
  %s5 = inlined_call_operand.vmem [shape: bf16[128,128], index: 5, kind: input, shape index: {}]
  %s6 = inlined_call_operand.vmem [shape: f32[1,128], index: 6, kind: input, shape index: {}]
  %s7 = inlined_call_operand.vmem [shape: bf16[16,128], index: 7, kind: output, shape index: {}]
  %s8 = sld [smem:[#allocation0]]
  $region38: #{net_forward.1} parent=0
    _
  %s10 = ssub.s32 1, %s8
  %s11 = scalar_select 0, %s10, %s8
  // Predicated region
  $region2: #{net_forward.1} parent=0 // pred_check
    _
  $region3: #{net_forward.1} parent=0 // pred_check_branch
    %13 = sbr.rel (0) target = $region5
  $region4: #{net_forward.1} parent=0 // pred_region
    _
  $region5: #{net_forward.1} parent=0 // pred_fallthru
    _
  // Predicated region
  $region6: #{net_forward.1} parent=0 // pred_check
    _
  $region7: #{net_forward.1} parent=0 // pred_check_branch
    %15 = sbr.rel (0) target = $region9
  $region8: #{net_forward.1} parent=0 // pred_region
    _
  $region9: #{net_forward.1} parent=0 // pred_fallthru
    _
  // Predicated region
  $region10: #{net_forward.1} parent=0 // pred_check
    _
  $region11: #{net_forward.1} parent=0 // pred_check_branch
    %17 = sbr.rel (0) target = $region13
  $region12: #{net_forward.1} parent=0 // pred_region
    _
  $region13: #{net_forward.1} parent=0 // pred_fallthru
    _
  // Predicated region
  $region14: #{net_forward.1} parent=0 // pred_check
    _
  $region15: #{net_forward.1} parent=0 // pred_check_branch
    %19 = sbr.rel (0) target = $region17
  $region16: #{net_forward.1} parent=0 // pred_region
    _
  $region17: #{net_forward.1} parent=0 // pred_fallthru
    _
  // Predicated region
  $region18: #{net_forward.1} parent=0 // pred_check
    _
  $region19: #{net_forward.1} parent=0 // pred_check_branch
    %21 = sbr.rel (0) target = $region21
  $region20: #{net_forward.1} parent=0 // pred_region
    _
  $region21: #{net_forward.1} parent=0 // pred_fallthru
    _
  // Predicated region
  $region22: #{net_forward.1} parent=0 // pred_check
    _
  $region23: #{net_forward.1} parent=0 // pred_check_branch
    %23 = sbr.rel (0) target = $region25
  $region24: #{net_forward.1} parent=0 // pred_region
    _
  $region25: #{net_forward.1} parent=0 // pred_fallthru
    _
  // Predicated region
  $region26: #{net_forward.1} parent=0 // pred_check
    _
  $region27: #{net_forward.1} parent=0 // pred_check_branch
    %25 = sbr.rel (0) target = $region29
  $region28: #{net_forward.1} parent=0 // pred_region
    _
  $region29: #{net_forward.1} parent=0 // pred_fallthru
    _
  %v27 = vld [vmem:[%s0] sm:$0xff]
  %v28 = vld [vmem:[%s0 + $0x8] sm:$0xff]
  %v29 = vld [vmem:[%s0 + $0x10] sm:$0xff]
  %v30 = vld [vmem:[%s0 + $0x18] sm:$0xff]
  %v31 = vld [vmem:[%s0 + $0x20] sm:$0xff]
  %v32 = vld [vmem:[%s0 + $0x28] sm:$0xff]
  %v33 = vld [vmem:[%s0 + $0x30] sm:$0xff]
  %v34 = vld [vmem:[%s0 + $0x38] sm:$0xff]
  %v35 = vld [vmem:[%s0 + $0x40] sm:$0xff]
  %v36 = vld [vmem:[%s0 + $0x48] sm:$0xff]
  %v37 = vld [vmem:[%s0 + $0x50] sm:$0xff]
  %v38 = vld [vmem:[%s0 + $0x58] sm:$0xff]
  %v39 = vld [vmem:[%s0 + $0x60] sm:$0xff]
  %v40 = vld [vmem:[%s0 + $0x68] sm:$0xff]
  %v41 = vpack.c.bf16 %v34, %v27
  %v42 = vpack.c.bf16 %v35, %v28
  %v43 = vpack.c.bf16 %v36, %v29
  %v44 = vpack.c.bf16 %v37, %v30
  %v45 = vpack.c.bf16 %v38, %v31
  %v46 = vpack.c.bf16 %v39, %v32
  %v47 = vpack.c.bf16 %v40, %v33
  %v48 = vld [vmem:[%s1] sm:$0xf]
  %v49 = vld [vmem:[%s1 + $0x4] sm:$0xf]
  %v50 = vld [vmem:[%s1 + $0x8] sm:$0xf]
  %v51 = vld [vmem:[%s1 + $0xc] sm:$0xf]
  %v52 = vld [vmem:[%s1 + $0x10] sm:$0xf]
  %v53 = vld [vmem:[%s1 + $0x14] sm:$0xf]
  %v54 = vld [vmem:[%s1 + $0x18] sm:$0xf]
  %v55 = vld [vmem:[%s1 + $0x1c] sm:$0xf]
  %v56 = vld [vmem:[%s1 + $0x20] sm:$0xf]
  %v57 = vld [vmem:[%s1 + $0x24] sm:$0xf]
  %v58 = vld [vmem:[%s1 + $0x28] sm:$0xf]
  %v59 = vld [vmem:[%s1 + $0x2c] sm:$0xf]
  %v60 = vld [vmem:[%s1 + $0x30] sm:$0xf]
  %v61 = vld [vmem:[%s1 + $0x34] sm:$0xf]
  %v62 = vld [vmem:[%s1 + $0x38] sm:$0xf]
  %v63 = vld [vmem:[%s1 + $0x3c] sm:$0xf]
  %v64 = vld [vmem:[%s1 + $0x40] sm:$0xf]
  %v65 = vld [vmem:[%s1 + $0x44] sm:$0xf]
  %v66 = vld [vmem:[%s1 + $0x48] sm:$0xf]
  %v67 = vld [vmem:[%s1 + $0x4c] sm:$0xf]
  %v68 = vld [vmem:[%s1 + $0x50] sm:$0xf]
  %v69 = vld [vmem:[%s1 + $0x54] sm:$0xf]
  %v70 = vld [vmem:[%s1 + $0x58] sm:$0xf]
  %v71 = vld [vmem:[%s1 + $0x5c] sm:$0xf]
  %v72 = vld [vmem:[%s1 + $0x60] sm:$0xf]
  %v73 = vld [vmem:[%s1 + $0x64] sm:$0xf]
  %v74 = vld [vmem:[%s1 + $0x68] sm:$0xf]
  %v75 = vld [vmem:[%s1 + $0x6c] sm:$0xf]
  %v76 = vld [vmem:[%s1 + $0x70] sm:$0xf]
  %v77 = vld [vmem:[%s1 + $0x74] sm:$0xf]
  %v78 = vld [vmem:[%s1 + $0x78] sm:$0xf]
  %v79 = vld [vmem:[%s1 + $0x7c] sm:$0xf]
  %v80 = vld [vmem:[%s1 + $0x80] sm:$0xf]
  %v81 = vld [vmem:[%s1 + $0x84] sm:$0xf]
  %v82 = vld [vmem:[%s1 + $0x88] sm:$0xf]
  %v83 = vld [vmem:[%s1 + $0x8c] sm:$0xf]
  %v84 = vld [vmem:[%s1 + $0x90] sm:$0xf]
  %v85 = vld [vmem:[%s1 + $0x94] sm:$0xf]
  %v86 = vld [vmem:[%s1 + $0x98] sm:$0xf]
  %v87 = vld [vmem:[%s1 + $0x9c] sm:$0xf]
  %v88 = vld [vmem:[%s1 + $0xa0] sm:$0xf]
  %v89 = vld [vmem:[%s1 + $0xa4] sm:$0xf]
  %v90 = vld [vmem:[%s1 + $0xa8] sm:$0xf]
  %v91 = vld [vmem:[%s1 + $0xac] sm:$0xf]
  %v92 = vld [vmem:[%s1 + $0xb0] sm:$0xf]
  %v93 = vld [vmem:[%s1 + $0xb4] sm:$0xf]
  %v94 = vld [vmem:[%s1 + $0xb8] sm:$0xf]
  %v95 = vld [vmem:[%s1 + $0xbc] sm:$0xf]
  %v96 = vld [vmem:[%s1 + $0xc0] sm:$0xf]
  %v97 = vld [vmem:[%s1 + $0xc4] sm:$0xf]
  %v98 = vld [vmem:[%s1 + $0xc8] sm:$0xf]
  %v99 = vld [vmem:[%s1 + $0xcc] sm:$0xf]
  %v100 = vld [vmem:[%s1 + $0xd0] sm:$0xf]
  %v101 = vld [vmem:[%s1 + $0xd4] sm:$0xf]
  %v102 = vld [vmem:[%s1 + $0xd8] sm:$0xf]
  %v103 = vld [vmem:[%s1 + $0xdc] sm:$0xf]
  %v104 = vld [vmem:[%s1 + $0xe0] sm:$0xf]
  %v105 = vld [vmem:[%s1 + $0xe4] sm:$0xf]
  %v106 = vld [vmem:[%s1 + $0xe8] sm:$0xf]
  %v107 = vld [vmem:[%s1 + $0xec] sm:$0xf]
  %v108 = vld [vmem:[%s1 + $0xf0] sm:$0xf]
  %v109 = vld [vmem:[%s1 + $0xf4] sm:$0xf]
  %v110 = vld [vmem:[%s1 + $0xf8] sm:$0xf]
  %v111 = vld [vmem:[%s1 + $0xfc] sm:$0xf]
  %v112 = vld [vmem:[%s1 + $0x100] sm:$0xf]
  %v113 = vld [vmem:[%s1 + $0x104] sm:$0xf]
  %v114 = vld [vmem:[%s1 + $0x108] sm:$0xf]
  %v115 = vld [vmem:[%s1 + $0x10c] sm:$0xf]
  %v116 = vld [vmem:[%s1 + $0x110] sm:$0xf]
  %v117 = vld [vmem:[%s1 + $0x114] sm:$0xf]
  %v118 = vld [vmem:[%s1 + $0x118] sm:$0xf]
  %v119 = vld [vmem:[%s1 + $0x11c] sm:$0xf]
  %v120 = vld [vmem:[%s1 + $0x120] sm:$0xf]
  %v121 = vld [vmem:[%s1 + $0x124] sm:$0xf]
  %v122 = vld [vmem:[%s1 + $0x128] sm:$0xf]
  %v123 = vld [vmem:[%s1 + $0x12c] sm:$0xf]
  %v124 = vld [vmem:[%s1 + $0x130] sm:$0xf]
  %v125 = vld [vmem:[%s1 + $0x134] sm:$0xf]
  %v126 = vld [vmem:[%s1 + $0x138] sm:$0xf]
  %v127 = vld [vmem:[%s1 + $0x13c] sm:$0xf]
  %v128 = vld [vmem:[%s1 + $0x140] sm:$0xf]
  %v129 = vld [vmem:[%s1 + $0x144] sm:$0xf]
  %v130 = vld [vmem:[%s1 + $0x148] sm:$0xf]
  %v131 = vld [vmem:[%s1 + $0x14c] sm:$0xf]
  %v132 = vld [vmem:[%s1 + $0x150] sm:$0xf]
  %v133 = vld [vmem:[%s1 + $0x154] sm:$0xf]
  %v134 = vld [vmem:[%s1 + $0x158] sm:$0xf]
  %v135 = vld [vmem:[%s1 + $0x15c] sm:$0xf]
  %v136 = vld [vmem:[%s1 + $0x160] sm:$0xf]
  %v137 = vld [vmem:[%s1 + $0x164] sm:$0xf]
  %v138 = vld [vmem:[%s1 + $0x168] sm:$0xf]
  %v139 = vld [vmem:[%s1 + $0x16c] sm:$0xf]
  %v140 = vld [vmem:[%s1 + $0x170] sm:$0xf]
  %v141 = vld [vmem:[%s1 + $0x174] sm:$0xf]
  %v142 = vld [vmem:[%s1 + $0x178] sm:$0xf]
  %v143 = vld [vmem:[%s1 + $0x17c] sm:$0xf]
  %v144 = vld [vmem:[%s1 + $0x180] sm:$0xf]
  %v145 = vld [vmem:[%s1 + $0x184] sm:$0xf]
  %v146 = vld [vmem:[%s2] sm:$0x1]
  %v148 = vlaneseq
  %v149 = vshrl.u32 %v148, 7
  %v150 = vsub.s32 0, %v149
  %v151 = vrot.slane %v146, %v150
  %v251 = vunpack.c.l.b16 %v48
  %v252 = vunpack.c.l.b16 %v49
  %v253 = vunpack.c.l.b16 %v50
  %v254 = vunpack.c.l.b16 %v51
  %v255 = vunpack.c.l.b16 %v52
  %v256 = vunpack.c.l.b16 %v53
  %v257 = vunpack.c.l.b16 %v54
  %v258 = vunpack.c.l.b16 %v55
  %v259 = vunpack.c.l.b16 %v56
  %v260 = vunpack.c.l.b16 %v57
  %v261 = vunpack.c.l.b16 %v58
  %v262 = vunpack.c.l.b16 %v59
  %v263 = vunpack.c.l.b16 %v60
  %v264 = vunpack.c.l.b16 %v61
  %v265 = vunpack.c.l.b16 %v62
  %v266 = vunpack.c.l.b16 %v63
  %v267 = vunpack.c.l.b16 %v64
  %v268 = vunpack.c.l.b16 %v65
  %v269 = vunpack.c.l.b16 %v66
  %v270 = vunpack.c.l.b16 %v67
  %v271 = vunpack.c.l.b16 %v68
  %v272 = vunpack.c.l.b16 %v69
  %v273 = vunpack.c.l.b16 %v70
  %v274 = vunpack.c.l.b16 %v71
  %v275 = vunpack.c.l.b16 %v72
  %v276 = vunpack.c.l.b16 %v73
  %v277 = vunpack.c.l.b16 %v74
  %v278 = vunpack.c.l.b16 %v75
  %v279 = vunpack.c.l.b16 %v76
  %v280 = vunpack.c.l.b16 %v77
  %v281 = vunpack.c.l.b16 %v78
  %v282 = vunpack.c.l.b16 %v79
  %v283 = vunpack.c.l.b16 %v80
  %v284 = vunpack.c.l.b16 %v81
  %v285 = vunpack.c.l.b16 %v82
  %v286 = vunpack.c.l.b16 %v83
  %v287 = vunpack.c.l.b16 %v84
  %v288 = vunpack.c.l.b16 %v85
  %v289 = vunpack.c.l.b16 %v86
  %v290 = vunpack.c.l.b16 %v87
  %v291 = vunpack.c.l.b16 %v88
  %v292 = vunpack.c.l.b16 %v89
  %v293 = vunpack.c.l.b16 %v90
  %v294 = vunpack.c.l.b16 %v91
  %v295 = vunpack.c.l.b16 %v92
  %v296 = vunpack.c.l.b16 %v93
  %v297 = vunpack.c.l.b16 %v94
  %v298 = vunpack.c.l.b16 %v95
  %v299 = vunpack.c.l.b16 %v96
  %v300 = vunpack.c.l.b16 %v97
  %v301 = vunpack.c.l.b16 %v98
  %v302 = vunpack.c.l.b16 %v99
  %v303 = vunpack.c.l.b16 %v100
  %v304 = vunpack.c.l.b16 %v101
  %v305 = vunpack.c.l.b16 %v102
  %v306 = vunpack.c.l.b16 %v103
  %v307 = vunpack.c.l.b16 %v104
  %v308 = vunpack.c.l.b16 %v105
  %v309 = vunpack.c.l.b16 %v106
  %v310 = vunpack.c.l.b16 %v107
  %v311 = vunpack.c.l.b16 %v108
  %v312 = vunpack.c.l.b16 %v109
  %v313 = vunpack.c.l.b16 %v110
  %v314 = vunpack.c.l.b16 %v111
  %v315 = vunpack.c.l.b16 %v112
  %v316 = vunpack.c.l.b16 %v113
  %v317 = vunpack.c.l.b16 %v114
  %v318 = vunpack.c.l.b16 %v115
  %v319 = vunpack.c.l.b16 %v116
  %v320 = vunpack.c.l.b16 %v117
  %v321 = vunpack.c.l.b16 %v118
  %v322 = vunpack.c.l.b16 %v119
  %v323 = vunpack.c.l.b16 %v120
  %v324 = vunpack.c.l.b16 %v121
  %v325 = vunpack.c.l.b16 %v122
  %v326 = vunpack.c.l.b16 %v123
  %v327 = vunpack.c.l.b16 %v124
  %v328 = vunpack.c.l.b16 %v125
  %v329 = vunpack.c.l.b16 %v126
  %v330 = vunpack.c.l.b16 %v127
  %v331 = vunpack.c.l.b16 %v128
  %v332 = vunpack.c.l.b16 %v129
  %v333 = vunpack.c.l.b16 %v130
  %v334 = vunpack.c.l.b16 %v131
  %v335 = vunpack.c.l.b16 %v132
  %v336 = vunpack.c.l.b16 %v133
  %v337 = vunpack.c.l.b16 %v134
  %v338 = vunpack.c.l.b16 %v135
  %v339 = vunpack.c.l.b16 %v136
  %v340 = vunpack.c.l.b16 %v137
  %v341 = vunpack.c.l.b16 %v138
  %v342 = vunpack.c.l.b16 %v139
  %v343 = vunpack.c.l.b16 %v140
  %v344 = vunpack.c.l.b16 %v141
  %v345 = vunpack.c.l.b16 %v142
  %v346 = vunpack.c.l.b16 %v143
  %v347 = vunpack.c.l.b16 %v144
  %v348 = vunpack.c.l.b16 %v145
  %v349 = vpack.c.b16 %v252, %v251
  %v350 = vpack.c.b16 %v254, %v253
  %v351 = vpack.c.b16 %v256, %v255
  %v352 = vpack.c.b16 %v258, %v257
  %v353 = vpack.c.b16 %v260, %v259
  %v354 = vpack.c.b16 %v262, %v261
  %v355 = vpack.c.b16 %v264, %v263
  %v356 = vpack.c.b16 %v266, %v265
  %v357 = vpack.c.b16 %v268, %v267
  %v358 = vpack.c.b16 %v270, %v269
  %v359 = vpack.c.b16 %v272, %v271
  %v360 = vpack.c.b16 %v274, %v273
  %v361 = vpack.c.b16 %v276, %v275
  %v362 = vpack.c.b16 %v278, %v277
  %v363 = vpack.c.b16 %v280, %v279
  %v364 = vpack.c.b16 %v282, %v281
  %v365 = vpack.c.b16 %v284, %v283
  %v366 = vpack.c.b16 %v286, %v285
  %v367 = vpack.c.b16 %v288, %v287
  %v368 = vpack.c.b16 %v290, %v289
  %v369 = vpack.c.b16 %v292, %v291
  %v370 = vpack.c.b16 %v294, %v293
  %v371 = vpack.c.b16 %v296, %v295
  %v372 = vpack.c.b16 %v298, %v297
  %v373 = vpack.c.b16 %v300, %v299
  %v374 = vpack.c.b16 %v302, %v301
  %v375 = vpack.c.b16 %v304, %v303
  %v376 = vpack.c.b16 %v306, %v305
  %v377 = vpack.c.b16 %v308, %v307
  %v378 = vpack.c.b16 %v310, %v309
  %v379 = vpack.c.b16 %v312, %v311
  %v380 = vpack.c.b16 %v314, %v313
  %v381 = vpack.c.b16 %v316, %v315
  %v382 = vpack.c.b16 %v318, %v317
  %v383 = vpack.c.b16 %v320, %v319
  %v384 = vpack.c.b16 %v322, %v321
  %v385 = vpack.c.b16 %v324, %v323
  %v386 = vpack.c.b16 %v326, %v325
  %v387 = vpack.c.b16 %v328, %v327
  %v388 = vpack.c.b16 %v330, %v329
  %v389 = vpack.c.b16 %v332, %v331
  %v390 = vpack.c.b16 %v334, %v333
  %v391 = vpack.c.b16 %v336, %v335
  %v392 = vpack.c.b16 %v338, %v337
  %v393 = vpack.c.b16 %v340, %v339
  %v394 = vpack.c.b16 %v342, %v341
  %v395 = vpack.c.b16 %v344, %v343
  %v396 = vpack.c.b16 %v346, %v345
  %v397 = vpack.c.b16 %v348, %v347
  %vm447 = vcmask 130048
  %v449 = vsel %vm447, %v47, 0
  %451 = vmatprep.subr.bf16.mxu0 0
  %452 = vmatpush1.bf16.msra.mxu0 %v349
  %453 = vmatprep.subr.bf16.mxu0 0
  %454 = vmatpush1.bf16.msra.mxu0 %v350
  %455 = vmatprep.subr.bf16.mxu0 0
  %456 = vmatpush1.bf16.msra.mxu0 %v351
  %457 = vmatprep.subr.bf16.mxu0 0
  %458 = vmatpush1.bf16.msra.mxu0 %v352
  %459 = vmatprep.subr.bf16.mxu0 0
  %460 = vmatpush1.bf16.msra.mxu0 %v353
  %461 = vmatprep.subr.bf16.mxu0 0
  %462 = vmatpush1.bf16.msra.mxu0 %v354
  %463 = vmatprep.subr.bf16.mxu0 0
  %464 = vmatpush1.bf16.msra.mxu0 %v355
  %465 = vmatprep.subr.bf16.mxu0 0
  %466 = vmatpush1.bf16.msra.mxu0 %v356
  %467 = vmatprep.subr.bf16.mxu0 0
  %468 = vmatpush1.bf16.msra.mxu0 %v357
  %469 = vmatprep.subr.bf16.mxu0 0
  %470 = vmatpush1.bf16.msra.mxu0 %v358
  %471 = vmatprep.subr.bf16.mxu0 0
  %472 = vmatpush1.bf16.msra.mxu0 %v359
  %473 = vmatprep.subr.bf16.mxu0 0
  %474 = vmatpush1.bf16.msra.mxu0 %v360
  %475 = vmatprep.subr.bf16.mxu0 0
  %476 = vmatpush1.bf16.msra.mxu0 %v361
  %477 = vmatprep.subr.bf16.mxu0 0
  %478 = vmatpush1.bf16.msra.mxu0 %v362
  %479 = vmatprep.subr.bf16.mxu0 0
  %480 = vmatpush1.bf16.msra.mxu0 %v363
  %481 = vmatprep.subr.bf16.mxu0 0
  %482 = vmatpush1.bf16.msra.mxu0 %v364
  %483 = vmatprep.mubr.bf16.mxu0 %v42
  %484 = vmatmul.mubr.bf16.gmra.mrb[0].mxu0 %v41
  %v485 = vpop.f32.mrb[0].mxu0
  %v486 = vadd.f32 %v151, %v485
  %v487 = vpop.f32.mrb[0].mxu0
  %v488 = vpop.f32.mrb[0].mxu0
  %v489 = vadd.f32 %v151, %v488
  %v490 = vpop.f32.mrb[0].mxu0
  %491 = vdwg.mxu0
  %492 = vmatprep.subr.bf16.mxu0 0
  %493 = vmatpush1.bf16.msra.mxu0 %v365
  %494 = vmatprep.subr.bf16.mxu0 0
  %495 = vmatpush1.bf16.msra.mxu0 %v366
  %496 = vmatprep.subr.bf16.mxu0 0
  %497 = vmatpush1.bf16.msra.mxu0 %v367
  %498 = vmatprep.subr.bf16.mxu0 0
  %499 = vmatpush1.bf16.msra.mxu0 %v368
  %500 = vmatprep.subr.bf16.mxu0 0
  %501 = vmatpush1.bf16.msra.mxu0 %v369
  %502 = vmatprep.subr.bf16.mxu0 0
  %503 = vmatpush1.bf16.msra.mxu0 %v370
  %504 = vmatprep.subr.bf16.mxu0 0
  %505 = vmatpush1.bf16.msra.mxu0 %v371
  %506 = vmatprep.subr.bf16.mxu0 0
  %507 = vmatpush1.bf16.msra.mxu0 %v372
  %508 = vmatprep.subr.bf16.mxu0 0
  %509 = vmatpush1.bf16.msra.mxu0 %v373
  %510 = vmatprep.subr.bf16.mxu0 0
  %511 = vmatpush1.bf16.msra.mxu0 %v374
  %512 = vmatprep.subr.bf16.mxu0 0
  %513 = vmatpush1.bf16.msra.mxu0 %v375
  %514 = vmatprep.subr.bf16.mxu0 0
  %515 = vmatpush1.bf16.msra.mxu0 %v376
  %516 = vmatprep.subr.bf16.mxu0 0
  %517 = vmatpush1.bf16.msra.mxu0 %v377
  %518 = vmatprep.subr.bf16.mxu0 0
  %519 = vmatpush1.bf16.msra.mxu0 %v378
  %520 = vmatprep.subr.bf16.mxu0 0
  %521 = vmatpush1.bf16.msra.mxu0 %v379
  %522 = vmatprep.subr.bf16.mxu0 0
  %523 = vmatpush1.bf16.msra.mxu0 %v380
  %524 = vmatprep.mubr.bf16.mxu0 %v44
  %525 = vmatmul.mubr.bf16.gmra.mrb[0].mxu0 %v43
  %v526 = vpop.f32.mrb[0].mxu0
  %v527 = vadd.f32 %v486, %v526
  %v528 = vpop.f32.mrb[0].mxu0
  %v529 = vpop.f32.mrb[0].mxu0
  %v530 = vadd.f32 %v489, %v529
  %v531 = vpop.f32.mrb[0].mxu0
  %532 = vdwg.mxu0
  %533 = vmatprep.subr.bf16.mxu0 0
  %534 = vmatpush1.bf16.msra.mxu0 %v381
  %535 = vmatprep.subr.bf16.mxu0 0
  %536 = vmatpush1.bf16.msra.mxu0 %v382
  %537 = vmatprep.subr.bf16.mxu0 0
  %538 = vmatpush1.bf16.msra.mxu0 %v383
  %539 = vmatprep.subr.bf16.mxu0 0
  %540 = vmatpush1.bf16.msra.mxu0 %v384
  %541 = vmatprep.subr.bf16.mxu0 0
  %542 = vmatpush1.bf16.msra.mxu0 %v385
  %543 = vmatprep.subr.bf16.mxu0 0
  %544 = vmatpush1.bf16.msra.mxu0 %v386
  %545 = vmatprep.subr.bf16.mxu0 0
  %546 = vmatpush1.bf16.msra.mxu0 %v387
  %547 = vmatprep.subr.bf16.mxu0 0
  %548 = vmatpush1.bf16.msra.mxu0 %v388
  %549 = vmatprep.subr.bf16.mxu0 0
  %550 = vmatpush1.bf16.msra.mxu0 %v389
  %551 = vmatprep.subr.bf16.mxu0 0
  %552 = vmatpush1.bf16.msra.mxu0 %v390
  %553 = vmatprep.subr.bf16.mxu0 0
  %554 = vmatpush1.bf16.msra.mxu0 %v391
  %555 = vmatprep.subr.bf16.mxu0 0
  %556 = vmatpush1.bf16.msra.mxu0 %v392
  %557 = vmatprep.subr.bf16.mxu0 0
  %558 = vmatpush1.bf16.msra.mxu0 %v393
  %559 = vmatprep.subr.bf16.mxu0 0
  %560 = vmatpush1.bf16.msra.mxu0 %v394
  %561 = vmatprep.subr.bf16.mxu0 0
  %562 = vmatpush1.bf16.msra.mxu0 %v395
  %563 = vmatprep.subr.bf16.mxu0 0
  %564 = vmatpush1.bf16.msra.mxu0 %v396
  %565 = vmatprep.mubr.bf16.mxu0 %v46
  %566 = vmatmul.mubr.bf16.gmra.mrb[0].mxu0 %v45
  %v567 = vpop.f32.mrb[0].mxu0
  %v568 = vadd.f32 %v527, %v567
  %v569 = vpop.f32.mrb[0].mxu0
  %v570 = vpop.f32.mrb[0].mxu0
  %v571 = vadd.f32 %v530, %v570
  %v572 = vpop.f32.mrb[0].mxu0
  %573 = vdwg.mxu0
  %574 = vmatprep.subr.bf16.mxu0 0
  %575 = vmatpush1.bf16.msra.mxu0 %v397
  %576 = vmatprep.subr.bf16.mxu0 0
  %577 = vmatpush1.bf16.msra.mxu0 0
  %578 = vmatprep.subr.bf16.mxu0 0
  %579 = vmatpush1.bf16.msra.mxu0 0
  %580 = vmatprep.subr.bf16.mxu0 0
  %581 = vmatpush1.bf16.msra.mxu0 0
  %582 = vmatprep.subr.bf16.mxu0 0
  %583 = vmatpush1.bf16.msra.mxu0 0
  %584 = vmatprep.subr.bf16.mxu0 0
  %585 = vmatpush1.bf16.msra.mxu0 0
  %586 = vmatprep.subr.bf16.mxu0 0
  %587 = vmatpush1.bf16.msra.mxu0 0
  %588 = vmatprep.subr.bf16.mxu0 0
  %589 = vmatpush1.bf16.msra.mxu0 0
  %590 = vmatprep.subr.bf16.mxu0 0
  %591 = vmatpush1.bf16.msra.mxu0 0
  %592 = vmatprep.subr.bf16.mxu0 0
  %593 = vmatpush1.bf16.msra.mxu0 0
  %594 = vmatprep.subr.bf16.mxu0 0
  %595 = vmatpush1.bf16.msra.mxu0 0
  %596 = vmatprep.subr.bf16.mxu0 0
  %597 = vmatpush1.bf16.msra.mxu0 0
  %598 = vmatprep.subr.bf16.mxu0 0
  %599 = vmatpush1.bf16.msra.mxu0 0
  %600 = vmatprep.subr.bf16.mxu0 0
  %601 = vmatpush1.bf16.msra.mxu0 0
  %602 = vmatprep.subr.bf16.mxu0 0
  %603 = vmatpush1.bf16.msra.mxu0 0
  %604 = vmatprep.subr.bf16.mxu0 0
  %605 = vmatpush1.bf16.msra.mxu0 0
  %606 = vmatprep.mubr.bf16.mxu0 0
  %607 = vmatmul.mubr.bf16.gmra.mrb[0].mxu0 %v449
  %v608 = vpop.f32.mrb[0].mxu0
  %v609 = vadd.f32 %v568, %v608
  %v610 = vpop.f32.mrb[0].mxu0
  %v611 = vpop.f32.mrb[0].mxu0
  %v612 = vadd.f32 %v571, %v611
  %v613 = vpop.f32.mrb[0].mxu0
  %614 = vdwg.mxu0
  %v615 = vmax.f32 %v609, 0.0
  %v616 = vmax.f32 %v612, 0.0
  %v617 = vpack.c.bf16 %v616, %v615
  %v618 = vld [vmem:[%s3] sm:$0xf]
  %v619 = vld [vmem:[%s3 + $0x4] sm:$0xf]
  %v620 = vld [vmem:[%s3 + $0x8] sm:$0xf]
  %v621 = vld [vmem:[%s3 + $0xc] sm:$0xf]
  %v622 = vld [vmem:[%s3 + $0x10] sm:$0xf]
  %v623 = vld [vmem:[%s3 + $0x14] sm:$0xf]
  %v624 = vld [vmem:[%s3 + $0x18] sm:$0xf]
  %v625 = vld [vmem:[%s3 + $0x1c] sm:$0xf]
  %v626 = vld [vmem:[%s3 + $0x20] sm:$0xf]
  %v627 = vld [vmem:[%s3 + $0x24] sm:$0xf]
  %v628 = vld [vmem:[%s3 + $0x28] sm:$0xf]
  %v629 = vld [vmem:[%s3 + $0x2c] sm:$0xf]
  %v630 = vld [vmem:[%s3 + $0x30] sm:$0xf]
  %v631 = vld [vmem:[%s3 + $0x34] sm:$0xf]
  %v632 = vld [vmem:[%s3 + $0x38] sm:$0xf]
  %v633 = vld [vmem:[%s3 + $0x3c] sm:$0xf]
  %v634 = vld [vmem:[%s4] sm:$0x1]
  %v636 = vlaneseq
  %v637 = vshrl.u32 %v636, 7
  %v638 = vsub.s32 0, %v637
  %v639 = vrot.slane %v634, %v638
  %v657 = vunpack.c.l.b16 %v618
  %v658 = vunpack.c.l.b16 %v619
  %v659 = vunpack.c.l.b16 %v620
  %v660 = vunpack.c.l.b16 %v621
  %v661 = vunpack.c.l.b16 %v622
  %v662 = vunpack.c.l.b16 %v623
  %v663 = vunpack.c.l.b16 %v624
  %v664 = vunpack.c.l.b16 %v625
  %v665 = vunpack.c.l.b16 %v626
  %v666 = vunpack.c.l.b16 %v627
  %v667 = vunpack.c.l.b16 %v628
  %v668 = vunpack.c.l.b16 %v629
  %v669 = vunpack.c.l.b16 %v630
  %v670 = vunpack.c.l.b16 %v631
  %v671 = vunpack.c.l.b16 %v632
  %v672 = vunpack.c.l.b16 %v633
  %v673 = vpack.c.b16 %v658, %v657
  %v674 = vpack.c.b16 %v660, %v659
  %v675 = vpack.c.b16 %v662, %v661
  %v676 = vpack.c.b16 %v664, %v663
  %v677 = vpack.c.b16 %v666, %v665
  %v678 = vpack.c.b16 %v668, %v667
  %v679 = vpack.c.b16 %v670, %v669
  %v680 = vpack.c.b16 %v672, %v671
  %689 = vmatprep.subr.bf16.mxu0 0
  %690 = vmatpush1.bf16.msra.mxu0 %v673
  %691 = vmatprep.subr.bf16.mxu0 0
  %692 = vmatpush1.bf16.msra.mxu0 %v674
  %693 = vmatprep.subr.bf16.mxu0 0
  %694 = vmatpush1.bf16.msra.mxu0 %v675
  %695 = vmatprep.subr.bf16.mxu0 0
  %696 = vmatpush1.bf16.msra.mxu0 %v676
  %697 = vmatprep.subr.bf16.mxu0 0
  %698 = vmatpush1.bf16.msra.mxu0 %v677
  %699 = vmatprep.subr.bf16.mxu0 0
  %700 = vmatpush1.bf16.msra.mxu0 %v678
  %701 = vmatprep.subr.bf16.mxu0 0
  %702 = vmatpush1.bf16.msra.mxu0 %v679
  %703 = vmatprep.subr.bf16.mxu0 0
  %704 = vmatpush1.bf16.msra.mxu0 %v680
  %705 = vmatprep.subr.bf16.mxu0 0
  %706 = vmatpush1.bf16.msra.mxu0 0
  %707 = vmatprep.subr.bf16.mxu0 0
  %708 = vmatpush1.bf16.msra.mxu0 0
  %709 = vmatprep.subr.bf16.mxu0 0
  %710 = vmatpush1.bf16.msra.mxu0 0
  %711 = vmatprep.subr.bf16.mxu0 0
  %712 = vmatpush1.bf16.msra.mxu0 0
  %713 = vmatprep.subr.bf16.mxu0 0
  %714 = vmatpush1.bf16.msra.mxu0 0
  %715 = vmatprep.subr.bf16.mxu0 0
  %716 = vmatpush1.bf16.msra.mxu0 0
  %717 = vmatprep.subr.bf16.mxu0 0
  %718 = vmatpush1.bf16.msra.mxu0 0
  %719 = vmatprep.subr.bf16.mxu0 0
  %720 = vmatpush1.bf16.msra.mxu0 0
  %721 = vmatprep.mubr.bf16.mxu0 0
  %722 = vmatmul.mubr.bf16.gmra.mrb[0].mxu0 %v617
  %v723 = vpop.f32.mrb[0].mxu0
  %v724 = vadd.f32 %v639, %v723
  %v725 = vpop.f32.mrb[0].mxu0
  %v726 = vpop.f32.mrb[0].mxu0
  %v727 = vadd.f32 %v639, %v726
  %v728 = vpop.f32.mrb[0].mxu0
  %729 = vdwg.mxu0
  %v730 = vmax.f32 %v724, 0.0
  %v731 = vmax.f32 %v727, 0.0
  %v732 = vpack.c.bf16 %v731, %v730
  %v733 = vld [vmem:[%s5] sm:$0xf]
  %v734 = vld [vmem:[%s5 + $0x4] sm:$0xf]
  %v735 = vld [vmem:[%s5 + $0x8] sm:$0xf]
  %v736 = vld [vmem:[%s5 + $0xc] sm:$0xf]
  %v737 = vld [vmem:[%s5 + $0x10] sm:$0xf]
  %v738 = vld [vmem:[%s5 + $0x14] sm:$0xf]
  %v739 = vld [vmem:[%s5 + $0x18] sm:$0xf]
  %v740 = vld [vmem:[%s5 + $0x1c] sm:$0xf]
  %v741 = vld [vmem:[%s5 + $0x20] sm:$0xf]
  %v742 = vld [vmem:[%s5 + $0x24] sm:$0xf]
  %v743 = vld [vmem:[%s5 + $0x28] sm:$0xf]
  %v744 = vld [vmem:[%s5 + $0x2c] sm:$0xf]
  %v745 = vld [vmem:[%s5 + $0x30] sm:$0xf]
  %v746 = vld [vmem:[%s5 + $0x34] sm:$0xf]
  %v747 = vld [vmem:[%s5 + $0x38] sm:$0xf]
  %v748 = vld [vmem:[%s5 + $0x3c] sm:$0xf]
  %v749 = vld [vmem:[%s6] sm:$0x1]
  %v751 = vlaneseq
  %v752 = vshrl.u32 %v751, 7
  %v753 = vsub.s32 0, %v752
  %v754 = vrot.slane %v749, %v753
  %v772 = vunpack.c.l.b16 %v733
  %v773 = vunpack.c.l.b16 %v734
  %v774 = vunpack.c.l.b16 %v735
  %v775 = vunpack.c.l.b16 %v736
  %v776 = vunpack.c.l.b16 %v737
  %v777 = vunpack.c.l.b16 %v738
  %v778 = vunpack.c.l.b16 %v739
  %v779 = vunpack.c.l.b16 %v740
  %v780 = vunpack.c.l.b16 %v741
  %v781 = vunpack.c.l.b16 %v742
  %v782 = vunpack.c.l.b16 %v743
  %v783 = vunpack.c.l.b16 %v744
  %v784 = vunpack.c.l.b16 %v745
  %v785 = vunpack.c.l.b16 %v746
  %v786 = vunpack.c.l.b16 %v747
  %v787 = vunpack.c.l.b16 %v748
  %v788 = vpack.c.b16 %v773, %v772
  %v789 = vpack.c.b16 %v775, %v774
  %v790 = vpack.c.b16 %v777, %v776
  %v791 = vpack.c.b16 %v779, %v778
  %v792 = vpack.c.b16 %v781, %v780
  %v793 = vpack.c.b16 %v783, %v782
  %v794 = vpack.c.b16 %v785, %v784
  %v795 = vpack.c.b16 %v787, %v786
  %804 = vmatprep.subr.bf16.mxu0 0
  %805 = vmatpush1.bf16.msra.mxu0 %v788
  %806 = vmatprep.subr.bf16.mxu0 0
  %807 = vmatpush1.bf16.msra.mxu0 %v789
  %808 = vmatprep.subr.bf16.mxu0 0
  %809 = vmatpush1.bf16.msra.mxu0 %v790
  %810 = vmatprep.subr.bf16.mxu0 0
  %811 = vmatpush1.bf16.msra.mxu0 %v791
  %812 = vmatprep.subr.bf16.mxu0 0
  %813 = vmatpush1.bf16.msra.mxu0 %v792
  %814 = vmatprep.subr.bf16.mxu0 0
  %815 = vmatpush1.bf16.msra.mxu0 %v793
  %816 = vmatprep.subr.bf16.mxu0 0
  %817 = vmatpush1.bf16.msra.mxu0 %v794
  %818 = vmatprep.subr.bf16.mxu0 0
  %819 = vmatpush1.bf16.msra.mxu0 %v795
  %820 = vmatprep.subr.bf16.mxu0 0
  %821 = vmatpush1.bf16.msra.mxu0 0
  %822 = vmatprep.subr.bf16.mxu0 0
  %823 = vmatpush1.bf16.msra.mxu0 0
  %824 = vmatprep.subr.bf16.mxu0 0
  %825 = vmatpush1.bf16.msra.mxu0 0
  %826 = vmatprep.subr.bf16.mxu0 0
  %827 = vmatpush1.bf16.msra.mxu0 0
  %828 = vmatprep.subr.bf16.mxu0 0
  %829 = vmatpush1.bf16.msra.mxu0 0
  %830 = vmatprep.subr.bf16.mxu0 0
  %831 = vmatpush1.bf16.msra.mxu0 0
  %832 = vmatprep.subr.bf16.mxu0 0
  %833 = vmatpush1.bf16.msra.mxu0 0
  %834 = vmatprep.subr.bf16.mxu0 0
  %835 = vmatpush1.bf16.msra.mxu0 0
  %836 = vmatprep.mubr.bf16.mxu0 0
  %837 = vmatmul.mubr.bf16.gmra.mrb[0].mxu0 %v732
  %v838 = vpop.f32.mrb[0].mxu0
  %v839 = vadd.f32 %v754, %v838
  %v840 = vpop.f32.mrb[0].mxu0
  %v841 = vpop.f32.mrb[0].mxu0
  %v842 = vadd.f32 %v754, %v841
  %v843 = vpop.f32.mrb[0].mxu0
  %844 = vdwg.mxu0
  %845 = vmax.xlane.f32.xlu0 %v839
  %v846 = vpop.xlane.xlu0 %845
  %847 = vmax.xlane.f32.xlu0 %v842
  %v848 = vpop.xlane.xlu0 %847
  %v849 = vsub.f32 %v839, %v846
  %v850 = vsub.f32 %v842, %v848
  %v851 = vmul.f32 %v849, 1.442695
  %v852 = vpow.pop %v851
  %v853 = vmul.f32 %v850, 1.442695
  %v854 = vpow.pop %v853
  %855 = vadd.xlane.f32.xlu0 %v852
  %v856 = vpop.xlane.xlu0 %855
  %857 = vadd.xlane.f32.xlu0 %v854
  %v858 = vpop.xlane.xlu0 %857
  %v859 = vlog2.pop %v856
  %v860 = vmul.f32 %v859, 0.6931472
  %v861 = vlog2.pop %v858
  %v862 = vmul.f32 %v861, 0.6931472
  %v863 = vsub.f32 %v849, %v860
  %v864 = vsub.f32 %v850, %v862
  %v865 = vpack.c.bf16 %v864, %v863
  %v867 = vunpack.c.l.b16 %v865
  %v868 = vunpack.c.h.b16 %v865
  %v869 = vpack.c.b16 %v867, %v867
  %v870 = vpack.c.b16 %v868, %v868
  %873 = vst [vmem:[%s7] sm:$0xf] %v869
  %874 = vst [vmem:[%s7 + $0x4] sm:$0xf] %v870
  // Predicated region
  $region30: #{net_forward.1} parent=0 // pred_check
    _
  $region31: #{net_forward.1} parent=0 // pred_check_branch
    %876 = sbr.rel (0) target = $region33
  $region32: #{net_forward.1} parent=0 // pred_region
    _
  $region33: #{net_forward.1} parent=0 // pred_fallthru
    _
  // Predicated region
  $region34: #{net_forward.1} parent=0 // pred_check
    _
  $region35: #{net_forward.1} parent=0 // pred_check_branch
    %878 = sbr.rel (0) target = $region37
  $region36: #{net_forward.1} parent=0 // pred_region
    _
  $region37: #{net_forward.1} parent=0 // pred_fallthru
    _

</llo_original>
